<compile_context>
chip_gen: v6e
topology: v6e:2x2x1
jax: 0.10.0
libtpu: 0.0.40
codegen_flags: <defaults>
</compile_context>

<pallas_src>
import functools

import jax
import jax.numpy as jnp
from jax import lax
from jax.experimental import pallas as pl
from jax.experimental.pallas import tpu as pltpu


# ----------------------------------------------------------------------------
# Kernels
# ----------------------------------------------------------------------------
def _normalize_and_store(q, o_ref, qn):
    """q: (tm, tn) f32 in per-tile component-major layout; qn = tn // 4 (128-mult)."""
    q0 = q[:, 0 * qn:1 * qn]
    q1 = q[:, 1 * qn:2 * qn]
    q2 = q[:, 2 * qn:3 * qn]
    q3 = q[:, 3 * qn:4 * qn]
    ssq = q0 * q0 + q1 * q1 + q2 * q2 + q3 * q3          # VALU, lane-aligned slices
    inv = lax.rsqrt(jnp.maximum(ssq, 1e-30))              # EUP; eps guards zero pads
    o_ref[:, 0 * qn:1 * qn] = (q0 * inv).astype(o_ref.dtype)
    o_ref[:, 1 * qn:2 * qn] = (q1 * inv).astype(o_ref.dtype)
    o_ref[:, 2 * qn:3 * qn] = (q2 * inv).astype(o_ref.dtype)
    o_ref[:, 3 * qn:4 * qn] = (q3 * inv).astype(o_ref.dtype)


def _rotation_kernel_single_k(x_ref, w_ref, b_ref, o_ref, *, qn):
    """Grid = (B/tm, N/tn, 1): no accumulator, no phase gating."""
    q = jnp.dot(x_ref[...], w_ref[...],
                preferred_element_type=jnp.float32) + b_ref[...]
    _normalize_and_store(q, o_ref, qn)


def _rotation_kernel_multi_k(x_ref, w_ref, b_ref, o_ref, acc_ref, *, qn):
    """Grid = (B/tm, N/tn, D/tk) with K innermost ("arbitrary")."""
    k = pl.program_id(2)

    @pl.when(k == 0)
    def _():
        # Direct store (no += RMW, no bias pre-broadcast).
        acc_ref[...] = jnp.dot(x_ref[...], w_ref[...],
                               preferred_element_type=jnp.float32)

    @pl.when(k > 0)
    def _():
        acc_ref[...] += jnp.dot(x_ref[...], w_ref[...],
                                preferred_element_type=jnp.float32)

    @pl.when(k == pl.num_programs(2) - 1)
    def _():
        q = acc_ref[...] + b_ref[...]                      # bias added once here
        _normalize_and_store(q, o_ref, qn)


# ----------------------------------------------------------------------------
# Wrapper / parameter preparation
# ----------------------------------------------------------------------------
def _round_up(x, m):
    return ((x + m - 1) // m) * m


def _largest_divisor_tile(total, cap, align):
    """Largest multiple of `align` that divides `total` (a multiple of align), <= cap."""
    t = max(align, (min(cap, total) // align) * align)
    while total % t != 0:
        t -= align
    return t


def prepare_rotation_params(weight, bias, *, use_bf16=True, tn_cap=1024, tk_cap=1024):
    """One-time prep, hoisted out of the per-call path.

    weight: (M*4, D) PyTorch Linear layout; bias: (M*4,).
    Transposes the weight, pads M up to a multiple of 128 (so every output tile's
    component slices are lane-aligned), reorders columns to per-tile
    component-major, pads / tiles K, and casts the weight for the MXU.
    """
    out_dim, in_dim = weight.shape
    assert out_dim % 4 == 0, "output dim must be n_primitives * 4"
    m = out_dim // 4

    mp = _round_up(max(m, 1), 128)          # quaternions padded to lane multiple
    n_pad = 4 * mp
    tn = _largest_divisor_tile(n_pad, max(tn_cap, 512), 512)
    qn = tn // 4                            # quaternions per tile (multiple of 128)
    n_tiles = n_pad // tn

    if in_dim <= tk_cap:
        d_pad, tk = in_dim, in_dim          # single K step, no K padding
    else:
        d_pad = _round_up(in_dim, 128)
        tk = _largest_divisor_tile(d_pad, tk_cap, 128)

    compute_dtype = jnp.bfloat16 if use_bf16 else jnp.float32

    # Interleaved padded weight (D_pad, 4*Mp): column 4*q + c.
    w_il = jnp.zeros((d_pad, 4 * mp), jnp.float32)
    w_il = w_il.at[:in_dim, :out_dim].set(weight.T.astype(jnp.float32))
    # Per-tile component-major reorder: column -> tile*tn + c*qn + m_local.
    w_cm = (w_il.reshape(d_pad, n_tiles, qn, 4)
                 .transpose(0, 1, 3, 2)
                 .reshape(d_pad, n_pad)
                 .astype(compute_dtype))

    b_il = jnp.zeros((4 * mp,), jnp.float32).at[:out_dim].set(bias.astype(jnp.float32))
    b_cm = (b_il.reshape(n_tiles, qn, 4)
                 .transpose(0, 2, 1)
                 .reshape(1, n_pad))

    return dict(w_cm=w_cm, b_cm=b_cm,
                in_dim=in_dim, out_dim=out_dim, n_primitives=m,
                d_pad=d_pad, n_pad=n_pad, tk=tk, tn=tn, qn=qn, n_tiles=n_tiles,
                compute_dtype=compute_dtype)


def rotation_forward(x, params, *, tm_cap=512):
    """x: (B, D) features -> (B, M*4) normalized quaternions (float32)."""
    B, D = x.shape
    assert D == params["in_dim"]
    d_pad, n_pad = params["d_pad"], params["n_pad"]
    tk, tn, qn = params["tk"], params["tn"], params["qn"]

    tm = min(tm_cap, _round_up(B, 16))      # bf16 packs 16 rows/vreg
    b_pad = _round_up(B, tm)

    xp = x.astype(params["compute_dtype"])
    if b_pad != B or d_pad != D:
        xp = jnp.zeros((b_pad, d_pad), params["compute_dtype"]).at[:B, :D].set(xp)

    kt = d_pad // tk
    grid = (b_pad // tm, n_pad // tn, kt)

    if kt == 1:
        kernel = functools.partial(_rotation_kernel_single_k, qn=qn)
        scratch = []
    else:
        kernel = functools.partial(_rotation_kernel_multi_k, qn=qn)
        scratch = [pltpu.VMEM((tm, tn), jnp.float32)]

    out_cm = pl.pallas_call(
        kernel,
        out_shape=jax.ShapeDtypeStruct((b_pad, n_pad), jnp.float32),
        grid_spec=pltpu.PrefetchScalarGridSpec(
            num_scalar_prefetch=0,
            grid=grid,
            in_specs=[
                pl.BlockSpec((tm, tk), lambda i, j, k: (i, k)),   # x tile
                pl.BlockSpec((tk, tn), lambda i, j, k: (k, j)),   # weight tile (cm)
                pl.BlockSpec((1, tn),  lambda i, j, k: (0, j)),   # bias tile (cm)
            ],
            out_specs=pl.BlockSpec((tm, tn), lambda i, j, k: (i, j)),
            scratch_shapes=scratch,
        ),
        compiler_params=pltpu.CompilerParams(
            dimension_semantics=("parallel", "parallel", "arbitrary"),
            vmem_limit_bytes=32 * 1024 * 1024,
        ),
    )(xp, params["w_cm"], params["b_cm"])

    # Undo per-tile component-major layout -> interleaved (B, M*4); tiny reshape.
    n_tiles = params["n_tiles"]
    out = (out_cm[:B]
           .reshape(B, n_tiles, 4, qn)
           .transpose(0, 1, 3, 2)
           .reshape(B, n_pad)[:, :params["out_dim"]])
    return out


# ----------------------------------------------------------------------------
# Pure-JAX reference (matches the PyTorch forward)
# ----------------------------------------------------------------------------
def rotation_reference(x, weight, bias, n_primitives, matmul_dtype=jnp.float32):
    q = jnp.dot(x.astype(matmul_dtype), weight.T.astype(matmul_dtype),
                preferred_element_type=jnp.float32) + bias.astype(jnp.float32)
    q = q.reshape(x.shape[0], n_primitives, 4)
    nrm = jnp.sqrt(jnp.sum(q * q, axis=-1, keepdims=True))
    return (q / nrm).reshape(x.shape[0], n_primitives * 4)


def _run_case(B, D, M, seed=0):
    out_dim = M * 4
    key = jax.random.PRNGKey(seed)
    kx, kw, kb = jax.random.split(key, 3)
    x = jax.random.normal(kx, (B, D), dtype=jnp.float32)
    # PyTorch Linear layout: weight (out, in), bias (out,)
    weight = jax.random.normal(kw, (out_dim, D), dtype=jnp.float32) * (1.0 / jnp.sqrt(D))
    bias = jax.random.normal(kb, (out_dim,), dtype=jnp.float32) * 0.01

    params = prepare_rotation_params(weight, bias, use_bf16=True)
    out = jax.block_until_ready(rotation_forward(x, params))

    assert out.shape == (B, out_dim)
    assert not bool(jnp.any(jnp.isnan(out))), "NaN in output"

    # Tight check vs a reference using the same bf16-input / f32-accum matmul.
    ref_same = rotation_reference(x, weight, bias, M, matmul_dtype=jnp.bfloat16)
    assert jnp.allclose(out, ref_same, atol=1e-4, rtol=1e-4), "mismatch vs bf16 reference"

    # Loose check vs the full-f32 PyTorch-equivalent reference (bf16 matmul error).
    ref_f32 = rotation_reference(x, weight, bias, M, matmul_dtype=jnp.float32)
    assert jnp.allclose(out, ref_f32, atol=3e-2, rtol=3e-2), "mismatch vs f32 reference"


if __name__ == "__main__":
    # Small shapes consistent with the module: B=2 features of dim 32, M=8 primitives
    # (single-K fast path).
    _run_case(B=2, D=32, M=8, seed=0)
    # Larger feature dim to exercise the multi-K accumulator path.
    _run_case(B=4, D=1536, M=8, seed=1)
    print("KERNEL_OK")
</pallas_src>

<mosaic_0001>
module attributes {stable_mosaic.version = 11 : i64} {
  func.func @_rotation_kernel_single_k(%arg0: i32, %arg1: i32, %arg2: i32, %arg3: memref<16x32xbf16, #tpu.memory_space<vmem>>, %arg4: memref<32x512xbf16, #tpu.memory_space<vmem>>, %arg5: memref<1x512xf32, #tpu.memory_space<vmem>>, %arg6: memref<16x512xf32, #tpu.memory_space<vmem>>) attributes {dimension_semantics = [#tpu.dimension_semantics<parallel>, #tpu.dimension_semantics<parallel>, #tpu.dimension_semantics<arbitrary>], iteration_bounds = array<i64: 1, 1, 1>, scalar_prefetch = 0 : i64, scratch_operands = 0 : i64, tpu.core_type = #tpu.core_type<tc>, window_params = [{transform_indices = @transform_0, window_bounds = array<i64: 16, 32>}, {transform_indices = @transform_1, window_bounds = array<i64: 32, 512>}, {transform_indices = @transform_2, window_bounds = array<i64: 1, 512>}, {transform_indices = @transform_3, window_bounds = array<i64: 16, 512>}]} {
    %c0 = arith.constant 0 : index
    %c0_0 = arith.constant 0 : index
    %0 = vector.load %arg3[%c0, %c0_0] : memref<16x32xbf16, #tpu.memory_space<vmem>>, vector<16x32xbf16>
    %c0_1 = arith.constant 0 : index
    %c0_2 = arith.constant 0 : index
    %1 = vector.load %arg4[%c0_1, %c0_2] : memref<32x512xbf16, #tpu.memory_space<vmem>>, vector<32x512xbf16>
    %cst = arith.constant dense<0.000000e+00> : vector<16x512xf32>
    %2 = tpu.matmul %0, %1, %cst {dimension_numbers = #tpu.dot_dimension_numbers<[1], [0], [0], [1], [0, 0, 1, 1], [], []>} : vector<16x32xbf16>, vector<32x512xbf16>, vector<16x512xf32> -> vector<16x512xf32>
    %c0_3 = arith.constant 0 : index
    %c0_4 = arith.constant 0 : index
    %3 = vector.load %arg5[%c0_3, %c0_4] : memref<1x512xf32, #tpu.memory_space<vmem>>, vector<1x512xf32>
    %4 = vector.broadcast %3 : vector<1x512xf32> to vector<16x512xf32>
    %5 = arith.addf %2, %4 : vector<16x512xf32>
    %6 = vector.extract_strided_slice %5 {offsets = [0, 0], sizes = [16, 128], strides = [1, 1]} : vector<16x512xf32> to vector<16x128xf32>
    %7 = vector.extract_strided_slice %5 {offsets = [0, 128], sizes = [16, 128], strides = [1, 1]} : vector<16x512xf32> to vector<16x128xf32>
    %8 = vector.extract_strided_slice %5 {offsets = [0, 256], sizes = [16, 128], strides = [1, 1]} : vector<16x512xf32> to vector<16x128xf32>
    %9 = vector.extract_strided_slice %5 {offsets = [0, 384], sizes = [16, 128], strides = [1, 1]} : vector<16x512xf32> to vector<16x128xf32>
    %10 = arith.mulf %6, %6 : vector<16x128xf32>
    %11 = arith.mulf %7, %7 : vector<16x128xf32>
    %12 = arith.addf %10, %11 : vector<16x128xf32>
    %13 = arith.mulf %8, %8 : vector<16x128xf32>
    %14 = arith.addf %12, %13 : vector<16x128xf32>
    %15 = arith.mulf %9, %9 : vector<16x128xf32>
    %16 = arith.addf %14, %15 : vector<16x128xf32>
    %cst_5 = arith.constant 1.000000e-30 : f32
    %17 = vector.broadcast %cst_5 : f32 to vector<16x128xf32>
    %18 = arith.maximumf %16, %17 : vector<16x128xf32>
    %19 = math.rsqrt %18 : vector<16x128xf32>
    %20 = arith.mulf %6, %19 : vector<16x128xf32>
    %c0_6 = arith.constant 0 : index
    %c0_7 = arith.constant 0 : index
    %21 = vector.load %arg6[%c0_6, %c0_7] : memref<16x512xf32, #tpu.memory_space<vmem>>, vector<16x128xf32>
    tpu.vector_store %arg6[%c0_6, %c0_7], %20 {strides = array<i32>} : memref<16x512xf32, #tpu.memory_space<vmem>>, vector<16x128xf32>,
    %22 = arith.mulf %7, %19 : vector<16x128xf32>
    %c0_8 = arith.constant 0 : index
    %c128 = arith.constant 128 : index
    %23 = vector.load %arg6[%c0_8, %c128] : memref<16x512xf32, #tpu.memory_space<vmem>>, vector<16x128xf32>
    tpu.vector_store %arg6[%c0_8, %c128], %22 {strides = array<i32>} : memref<16x512xf32, #tpu.memory_space<vmem>>, vector<16x128xf32>,
    %24 = arith.mulf %8, %19 : vector<16x128xf32>
    %c0_9 = arith.constant 0 : index
    %c256 = arith.constant 256 : index
    %25 = vector.load %arg6[%c0_9, %c256] : memref<16x512xf32, #tpu.memory_space<vmem>>, vector<16x128xf32>
    tpu.vector_store %arg6[%c0_9, %c256], %24 {strides = array<i32>} : memref<16x512xf32, #tpu.memory_space<vmem>>, vector<16x128xf32>,
    %26 = arith.mulf %9, %19 : vector<16x128xf32>
    %c0_10 = arith.constant 0 : index
    %c384 = arith.constant 384 : index
    %27 = vector.load %arg6[%c0_10, %c384] : memref<16x512xf32, #tpu.memory_space<vmem>>, vector<16x128xf32>
    tpu.vector_store %arg6[%c0_10, %c384], %26 {strides = array<i32>} : memref<16x512xf32, #tpu.memory_space<vmem>>, vector<16x128xf32>,
    return
  }
  func.func @transform_0(%arg0: i32, %arg1: i32, %arg2: i32) -> (i32, i32) {
    %c0_i32 = arith.constant 0 : i32
    return %arg0, %arg2 : i32, i32
  }
  func.func @transform_1(%arg0: i32, %arg1: i32, %arg2: i32) -> (i32, i32) {
    %c0_i32 = arith.constant 0 : i32
    return %arg2, %arg1 : i32, i32
  }
  func.func @transform_2(%arg0: i32, %arg1: i32, %arg2: i32) -> (i32, i32) {
    %c0_i32 = arith.constant 0 : i32
    %c0_i32_0 = arith.constant 0 : i32
    return %c0_i32, %arg1 : i32, i32
  }
  func.func @transform_3(%arg0: i32, %arg1: i32, %arg2: i32) -> (i32, i32) {
    %c0_i32 = arith.constant 0 : i32
    return %arg0, %arg1 : i32, i32
  }
}

</mosaic_0001>

<llo_original>
// kernel: tpu_custom_call.1
$region0: #{tpu_custom_call.1}
  #allocation0 [shape = 'u32[]', space=smem, size = 0x4, offset = 0x4, fixed_abs, tag = 'smem constant byte address 0x4 - core index']
  #allocation1 [shape = 'u32[144,128]{1,0:T(1,128)}', space=vmem, size = 0x12000, scoped, tag = 'internal scratch']
  %s0 = inlined_call_operand.hbm [shape: bf16[16,32], index: 0, kind: input, shape index: {}]
  %s1 = inlined_call_operand.hbm [shape: bf16[32,512], index: 1, kind: input, shape index: {}]
  %s2 = inlined_call_operand.hbm [shape: f32[1,512], index: 2, kind: input, shape index: {}]
  %s3 = inlined_call_operand.hbm [shape: f32[16,512], index: 3, kind: output, shape index: {}]
  %s4 = sld [smem:[#allocation0]]
  $region34: #{tpu_custom_call.1} parent=0
    _
  %s6 = ssub.s32 1, %s4
  %s7 = scalar_select 0, %s6, %s4
  $region1: #{tpu_custom_call.1} parent=0
    #allocation2 [shape = 'u8[4096]{0}', space=vmem, size = 0x1000, scoped, tag = 'input window, operand 0, single buffered']
    #allocation3 [shape = 's32[1]{0}', space=sflag, size = 0x4, scoped, tag = 'scoped memory for tpu_custom_call.1']
    #allocation4 [shape = 's32[1]{0}', space=sflag, size = 0x4, scoped, tag = 'scoped memory for tpu_custom_call.1']
    #allocation5 [shape = 'u8[32768]{0}', space=vmem, size = 0x8000, scoped, tag = 'input window, operand 1, single buffered']
    #allocation6 [shape = 's32[1]{0}', space=sflag, size = 0x4, scoped, tag = 'scoped memory for tpu_custom_call.1']
    #allocation7 [shape = 'u8[2048]{0}', space=vmem, size = 0x800, scoped, tag = 'input window, operand 2, single buffered']
    #allocation8 [shape = 'u8[32768]{0}', space=vmem, size = 0x8000, scoped, tag = 'output window, operand 0, single buffered']
    %8 = vsyncpa [#allocation3], 0
    %9 = vsyncpa [#allocation6], 0
    %10 = vsyncpa [#allocation4], 0
    // Predicated region
    $region2: #{tpu_custom_call.1} parent=1 // pred_check
      _
    $region3: #{tpu_custom_call.1} parent=1 // pred_check_branch
      %12 = sbr.rel (0) target = $region5
    $region4: #{tpu_custom_call.1} parent=1 // pred_region
      %s14 = ssub.s32 128, 128
      %15 = vsyncadd [#allocation3], %s14
      %s16 = sshll.u32 [#allocation2], 4
      %s17 = int_to_ptr.vmem [resolvable:$true] %s16
      %22 = dma.hbm_to_vmem [thread:$0]  %s0, 128, %s17, [#allocation3], 64, 64, 4
    $region5: #{tpu_custom_call.1} parent=1 // pred_fallthru
      _
    // Predicated region
    $region6: #{tpu_custom_call.1} parent=1 // pred_check
      _
    $region7: #{tpu_custom_call.1} parent=1 // pred_check_branch
      %24 = sbr.rel (0) target = $region9
    $region8: #{tpu_custom_call.1} parent=1 // pred_region
      %s26 = ssub.s32 1024, 1024
      %27 = vsyncadd [#allocation6], %s26
      %s28 = sshll.u32 [#allocation5], 4
      %s29 = int_to_ptr.vmem [resolvable:$true] %s28
      %34 = dma.hbm_to_vmem [thread:$0]  %s1, 1024, %s29, [#allocation6], 256, 256, 16
    $region9: #{tpu_custom_call.1} parent=1 // pred_fallthru
      _
    // Predicated region
    $region10: #{tpu_custom_call.1} parent=1 // pred_check
      _
    $region11: #{tpu_custom_call.1} parent=1 // pred_check_branch
      %36 = sbr.rel (0) target = $region13
    $region12: #{tpu_custom_call.1} parent=1 // pred_region
      %s38 = ssub.s32 64, 64
      %39 = vsyncadd [#allocation6], %s38
      %s41 = sshll.u32 [#allocation7], 4
      %s42 = int_to_ptr.vmem [resolvable:$true] %s41
      %44 = dma.hbm_to_vmem [thread:$0]  %s2, 64, %s42, [#allocation6]
    $region13: #{tpu_custom_call.1} parent=1 // pred_fallthru
      _
    // Predicated region
    $region14: #{tpu_custom_call.1} parent=1 // pred_check
      _
    $region15: #{tpu_custom_call.1} parent=1 // pred_check_branch
      %46 = sbr.rel (0) target = $region17
    $region16: #{tpu_custom_call.1} parent=1 // pred_region
      %47 = dma.done [#allocation3], 128
    $region17: #{tpu_custom_call.1} parent=1 // pred_fallthru
      _
    // Predicated region
    $region18: #{tpu_custom_call.1} parent=1 // pred_check
      _
    $region19: #{tpu_custom_call.1} parent=1 // pred_check_branch
      %49 = sbr.rel (0) target = $region21
    $region20: #{tpu_custom_call.1} parent=1 // pred_region
      %50 = dma.done [#allocation6], 1024
    $region21: #{tpu_custom_call.1} parent=1 // pred_fallthru
      _
    // Predicated region
    $region22: #{tpu_custom_call.1} parent=1 // pred_check
      _
    $region23: #{tpu_custom_call.1} parent=1 // pred_check_branch
      %52 = sbr.rel (0) target = $region25
    $region24: #{tpu_custom_call.1} parent=1 // pred_region
      %53 = dma.done [#allocation6], 64
    $region25: #{tpu_custom_call.1} parent=1 // pred_fallthru
      _
    %v55 = vld [vmem:[#allocation2] sm:$0xf]
    %v56 = vld [vmem:[#allocation2 + $0x4] sm:$0xf]
    %v57 = vld [vmem:[#allocation5] sm:$0xff]
    %v58 = vld [vmem:[#allocation5 + $0x8] sm:$0xff]
    %v59 = vld [vmem:[#allocation5 + $0x10] sm:$0xff]
    %v60 = vld [vmem:[#allocation5 + $0x18] sm:$0xff]
    %v61 = vld [vmem:[#allocation5 + $0x20] sm:$0xff]
    %v62 = vld [vmem:[#allocation5 + $0x28] sm:$0xff]
    %v63 = vld [vmem:[#allocation5 + $0x30] sm:$0xff]
    %v64 = vld [vmem:[#allocation5 + $0x38] sm:$0xff]
    %v65 = vld [vmem:[#allocation7] sm:$0xf]
    %v67 = vlaneseq
    %v68 = vshrl.u32 %v67, 7
    %v69 = vsub.s32 0, %v68
    %v70 = vrot.slane %v65, %v69
    %v71 = vlaneseq
    %v72 = vshrl.u32 %v71, 7
    %v73 = vsub.s32 1, %v72
    %v74 = vrot.slane %v65, %v73
    %v75 = vlaneseq
    %v76 = vshrl.u32 %v75, 7
    %v77 = vsub.s32 2, %v76
    %v78 = vrot.slane %v65, %v77
    %v79 = vlaneseq
    %v80 = vshrl.u32 %v79, 7
    %v81 = vsub.s32 3, %v80
    %v82 = vrot.slane %v65, %v81
    %v89 = vunpack.c.l.b16 %v55
    %v90 = vunpack.c.l.b16 %v56
    %v91 = vpack.c.b16 %v90, %v89
    %v100 = vunpack.c.l.b16 %v57
    %v101 = vunpack.c.h.b16 %v57
    %v102 = vunpack.c.l.b16 %v58
    %v103 = vunpack.c.h.b16 %v58
    %v104 = vunpack.c.l.b16 %v59
    %v105 = vunpack.c.h.b16 %v59
    %v106 = vunpack.c.l.b16 %v60
    %v107 = vunpack.c.h.b16 %v60
    %v108 = vunpack.c.l.b16 %v61
    %v109 = vunpack.c.h.b16 %v61
    %v110 = vunpack.c.l.b16 %v62
    %v111 = vunpack.c.h.b16 %v62
    %v112 = vunpack.c.l.b16 %v63
    %v113 = vunpack.c.h.b16 %v63
    %v114 = vunpack.c.l.b16 %v64
    %v115 = vunpack.c.h.b16 %v64
    %v116 = vpack.c.b16 %v104, %v100
    %v117 = vpack.c.b16 %v105, %v101
    %v118 = vpack.c.b16 %v106, %v102
    %v119 = vpack.c.b16 %v107, %v103
    %v120 = vpack.c.b16 %v112, %v108
    %v121 = vpack.c.b16 %v113, %v109
    %v122 = vpack.c.b16 %v114, %v110
    %v123 = vpack.c.b16 %v115, %v111
    %vm132 = vcmask 261120
    %v134 = vsel %vm132, %v91, 0
    %136 = vmatprep.subr.bf16.mxu0 0
    %137 = vmatpush1.bf16.msra.mxu0 0
    %138 = vmatprep.subr.bf16.mxu0 0
    %139 = vmatpush1.bf16.msra.mxu0 0
    %140 = vmatprep.subr.bf16.mxu0 0
    %141 = vmatpush1.bf16.msra.mxu0 0
    %142 = vmatprep.subr.bf16.mxu0 0
    %143 = vmatpush1.bf16.msra.mxu0 0
    %144 = vmatprep.subr.bf16.mxu0 0
    %145 = vmatpush1.bf16.msra.mxu0 0
    %146 = vmatprep.subr.bf16.mxu0 0
    %147 = vmatpush1.bf16.msra.mxu0 0
    %148 = vmatprep.subr.bf16.mxu0 %v121
    %149 = vmatpush1.bf16.msra.mxu0 %v120
    %150 = vmatprep.subr.bf16.mxu0 %v117
    %151 = vmatpush1.bf16.msra.mxu0 %v116
    %152 = vmatprep.subr.bf16.mxu0 0
    %153 = vmatpush2.bf16.msra.mxu0 0
    %154 = vmatprep.subr.bf16.mxu0 0
    %155 = vmatpush2.bf16.msra.mxu0 0
    %156 = vmatprep.subr.bf16.mxu0 0
    %157 = vmatpush2.bf16.msra.mxu0 0
    %158 = vmatprep.subr.bf16.mxu0 0
    %159 = vmatpush2.bf16.msra.mxu0 0
    %160 = vmatprep.subr.bf16.mxu0 0
    %161 = vmatpush2.bf16.msra.mxu0 0
    %162 = vmatprep.subr.bf16.mxu0 0
    %163 = vmatpush2.bf16.msra.mxu0 0
    %164 = vmatprep.subr.bf16.mxu0 0
    %165 = vmatpush2.bf16.msra.mxu0 0
    %166 = vmatprep.subr.bf16.mxu0 0
    %167 = vmatpush2.bf16.msra.mxu0 0
    %168 = vmatprep.mubr.bf16.mxu0 0
    %169 = vmatmul.mubr.bf16.gmra.mxu0 %v134
    %v170 = vpop.f32.mrf.mxu0
    %v171 = vadd.f32 %v70, %v170
    %v172 = vpop.f32.mrf.mxu0
    %v173 = vadd.f32 %v74, %v172
    %v174 = vpop.f32.mrf.mxu0
    %v175 = vadd.f32 %v70, %v174
    %v176 = vpop.f32.mrf.mxu0
    %v177 = vadd.f32 %v74, %v176
    %178 = vdwg.mxu0
    %179 = vmatprep.subr.bf16.mxu0 0
    %180 = vmatpush1.bf16.msra.mxu0 0
    %181 = vmatprep.subr.bf16.mxu0 0
    %182 = vmatpush1.bf16.msra.mxu0 0
    %183 = vmatprep.subr.bf16.mxu0 0
    %184 = vmatpush1.bf16.msra.mxu0 0
    %185 = vmatprep.subr.bf16.mxu0 0
    %186 = vmatpush1.bf16.msra.mxu0 0
    %187 = vmatprep.subr.bf16.mxu0 0
    %188 = vmatpush1.bf16.msra.mxu0 0
    %189 = vmatprep.subr.bf16.mxu0 0
    %190 = vmatpush1.bf16.msra.mxu0 0
    %191 = vmatprep.subr.bf16.mxu0 %v123
    %192 = vmatpush1.bf16.msra.mxu0 %v122
    %193 = vmatprep.subr.bf16.mxu0 %v119
    %194 = vmatpush1.bf16.msra.mxu0 %v118
    %195 = vmatprep.subr.bf16.mxu0 0
    %196 = vmatpush2.bf16.msra.mxu0 0
    %197 = vmatprep.subr.bf16.mxu0 0
    %198 = vmatpush2.bf16.msra.mxu0 0
    %199 = vmatprep.subr.bf16.mxu0 0
    %200 = vmatpush2.bf16.msra.mxu0 0
    %201 = vmatprep.subr.bf16.mxu0 0
    %202 = vmatpush2.bf16.msra.mxu0 0
    %203 = vmatprep.subr.bf16.mxu0 0
    %204 = vmatpush2.bf16.msra.mxu0 0
    %205 = vmatprep.subr.bf16.mxu0 0
    %206 = vmatpush2.bf16.msra.mxu0 0
    %207 = vmatprep.subr.bf16.mxu0 0
    %208 = vmatpush2.bf16.msra.mxu0 0
    %209 = vmatprep.subr.bf16.mxu0 0
    %210 = vmatpush2.bf16.msra.mxu0 0
    %211 = vmatprep.mubr.bf16.mxu0 0
    %212 = vmatmul.mubr.bf16.gmra.mxu0 %v134
    %v213 = vpop.f32.mrf.mxu0
    %v214 = vadd.f32 %v78, %v213
    %v215 = vpop.f32.mrf.mxu0
    %v216 = vadd.f32 %v82, %v215
    %v217 = vpop.f32.mrf.mxu0
    %v218 = vadd.f32 %v78, %v217
    %v219 = vpop.f32.mrf.mxu0
    %v220 = vadd.f32 %v82, %v219
    %221 = vdwg.mxu0
    %v222 = vmul.f32 %v171, %v171
    %v223 = vmul.f32 %v175, %v175
    %v224 = vmul.f32 %v173, %v173
    %v225 = vmul.f32 %v177, %v177
    %v226 = vadd.f32 %v222, %v224
    %v227 = vadd.f32 %v223, %v225
    %v228 = vmul.f32 %v214, %v214
    %v229 = vmul.f32 %v218, %v218
    %v230 = vadd.f32 %v226, %v228
    %v231 = vadd.f32 %v227, %v229
    %v232 = vmul.f32 %v216, %v216
    %v233 = vmul.f32 %v220, %v220
    %v234 = vadd.f32 %v230, %v232
    %v235 = vadd.f32 %v231, %v233
    %v236 = vmax.f32 %v234, 1e-30
    %v237 = vmax.f32 %v235, 1e-30
    %v238 = vrsqrt.pop %v236
    %v239 = vrsqrt.pop %v237
    %v240 = vmul.f32 %v171, %v238
    %v241 = vmul.f32 %v175, %v239
    %242 = vst [vmem:[#allocation8] sm:$0xff] %v240
    %243 = vst [vmem:[#allocation8 + $0x20] sm:$0xff] %v241
    %v244 = vmul.f32 %v173, %v238
    %v245 = vmul.f32 %v177, %v239
    %246 = vst [vmem:[#allocation8 + $0x8] sm:$0xff] %v244
    %247 = vst [vmem:[#allocation8 + $0x28] sm:$0xff] %v245
    %v248 = vmul.f32 %v214, %v238
    %v249 = vmul.f32 %v218, %v239
    %250 = vst [vmem:[#allocation8 + $0x10] sm:$0xff] %v248
    %251 = vst [vmem:[#allocation8 + $0x30] sm:$0xff] %v249
    %v252 = vmul.f32 %v216, %v238
    %v253 = vmul.f32 %v220, %v239
    %254 = vst [vmem:[#allocation8 + $0x18] sm:$0xff] %v252
    %255 = vst [vmem:[#allocation8 + $0x38] sm:$0xff] %v253
    // Predicated region
    $region26: #{tpu_custom_call.1} parent=1 // pred_check
      _
    $region27: #{tpu_custom_call.1} parent=1 // pred_check_branch
      %257 = sbr.rel (0) target = $region29
    $region28: #{tpu_custom_call.1} parent=1 // pred_region
      %s259 = ssub.s32 1024, 1024
      %260 = vsyncadd [#allocation4], %s259
      %s261 = sshll.u32 [#allocation8], 4
      %s262 = int_to_ptr.vmem [resolvable:$true] %s261
      %267 = dma.vmem_to_hbm [thread:$0]  %s262, 1024, %s3, [#allocation4], 512, 512, 32
    $region29: #{tpu_custom_call.1} parent=1 // pred_fallthru
      _
    // Predicated region
    $region30: #{tpu_custom_call.1} parent=1 // pred_check
      _
    $region31: #{tpu_custom_call.1} parent=1 // pred_check_branch
      %269 = sbr.rel (0) target = $region33
    $region32: #{tpu_custom_call.1} parent=1 // pred_region
      %270 = dma.done [#allocation4], 1024
    $region33: #{tpu_custom_call.1} parent=1 // pred_fallthru
      _
    %271 = vsyncpa [#allocation3], 1
    %272 = vsyncpa [#allocation6], 1
    %273 = vsyncpa [#allocation4], 1

</llo_original>
